<compile_context>
chip_gen: v6e
topology: v6e:2x2x1
jax: 0.10.0
libtpu: 0.0.40
codegen_flags: <defaults>
</compile_context>

<pallas_src>
import functools

import numpy as np
import jax
import jax.numpy as jnp
from jax.experimental import pallas as pl
from jax.experimental.pallas import tpu as pltpu


def _round_up(v, m):
    return (v + m - 1) // m * m


def _cdiv(a, b):
    return -(-a // b)


def _reduce_kernel(scale_ref, x_ref, idx_ref, out_ref, acc_ref, *,
                   mol_block, flush_rows):
    """One (core, atom-tile) grid step of the affine + segment-sum.

    scale_ref : SMEM (2,) f32            -- [E_i_stddev, E_i_mean]
    x_ref     : VMEM (rows, 128) f32     -- lane-dense per-atom property (pad = 0)
    idx_ref   : VMEM (rows, 128) i32     -- molecule index per atom (pad = -1)
    out_ref   : VMEM (1, M_pad, 1) f32   -- this core's per-molecule partial result
    acc_ref   : VMEM (M_pad, 128) f32    -- scratch accumulator (molecule x lane-slot)
    """
    t = pl.program_id(1)

    # Zero this core's accumulator on its first atom tile.
    @pl.when(t == 0)
    def _():
        acc_ref[...] = jnp.zeros_like(acc_ref)

    std = scale_ref[0]
    mean = scale_ref[1]

    m_pad = acc_ref.shape[0]
    rows = x_ref.shape[0]

    for mb in range(m_pad // mol_block):          # single iteration when M_pad <= 128
        lo = mb * mol_block
        # Molecule ids vary along sublanes, constant along lanes (hoisted, not in loop).
        mol_ids = jax.lax.broadcasted_iota(jnp.int32, (mol_block, 128), 0) + lo
        for r0 in range(0, rows, flush_rows):
            part = None
            for r in range(r0, min(r0 + flush_rows, rows)):
                # 128 atoms per row: affine rescale; padded atoms (idx == -1) never match.
                x_row = x_ref[r:r + 1, :] * std + mean                 # (1, 128)
                idx_row = idx_ref[r:r + 1, :]                          # (1, 128)
                contrib = jnp.where(idx_row == mol_ids, x_row, 0.0)    # (mol_block, 128)
                part = contrib if part is None else part + contrib
            # One scratch read-modify-write per `flush_rows` rows (full-vreg VALU adds).
            acc_ref[lo:lo + mol_block, :] += part

    # Finalize once per core: single cross-lane reduce + one tiny store.
    @pl.when(t == pl.num_programs(1) - 1)
    def _():
        out_ref[0] = jnp.sum(acc_ref[...], axis=1, keepdims=True)


def from_atom_to_molecule_reduction(x, atomic_subsystem_indices, num_molecules=None,
                                    e_i_mean=0.0, e_i_stddev=1.0,
                                    tile_n=8192, core_split=2):
    """JAX wrapper.

    x: [nr_of_atoms, 1] f32, atomic_subsystem_indices: [nr_of_atoms] int.
    Returns the per-molecule property of shape [num_molecules].

    Pass `num_molecules` explicitly for jit-friendliness; the fallback derives it as
    max(index)+1 (scatter-target semantics) which costs one host sync.
    Atoms whose index is outside [0, num_molecules) are silently dropped rather than
    raising like an out-of-range scatter_add would.
    """
    n_atoms = int(x.shape[0])
    if num_molecules is None:
        # TODO(synk): the PyTorch module sizes the output via len(indices.unique());
        # we use max(index)+1 (scatter-target semantics). This path forces a host
        # sync and breaks under jit -- pass num_molecules explicitly.
        num_molecules = int(jnp.max(atomic_subsystem_indices)) + 1
    num_molecules = max(int(num_molecules), 1)

    # Molecules live on sublanes of the accumulator: round to 8 (not 128) so the
    # one-hot work scales with the real molecule count when it is small.
    if num_molecules <= 128:
        m_pad = _round_up(num_molecules, 8)
        mol_block = m_pad
    else:
        m_pad = _round_up(num_molecules, 128)
        mol_block = 128
    # TODO(synk): for very large num_molecules with grouped indices, window the
    # compare via PrefetchScalarGridSpec (per-tile base molecule offset).

    core_split = max(int(core_split), 1)
    tile_n = max(1024, _round_up(int(tile_n), 1024))
    atoms_per_core = _cdiv(max(n_atoms, 1), core_split)
    tile_n_eff = min(tile_n, _round_up(atoms_per_core, 1024))
    tiles_per_core = _cdiv(atoms_per_core, tile_n_eff)
    rows_per_tile = tile_n_eff // 128
    n_rows = core_split * tiles_per_core * rows_per_tile
    n_pad = n_rows * 128

    # Lane-dense inputs: one pad + reshape each, no lane padding in HBM or DMA.
    x_dense = jnp.pad(jnp.asarray(x, jnp.float32).reshape(-1),
                      (0, n_pad - n_atoms)).reshape(n_rows, 128)
    idx_dense = jnp.pad(jnp.asarray(atomic_subsystem_indices, jnp.int32).reshape(-1),
                        (0, n_pad - n_atoms), constant_values=-1).reshape(n_rows, 128)

    # Registered buffers E_i_stddev, E_i_mean as SMEM scalars.
    scale = jnp.asarray([e_i_stddev, e_i_mean], jnp.float32)

    flush_rows = 8 if mol_block <= 32 else 4
    kernel = functools.partial(_reduce_kernel, mol_block=mol_block,
                               flush_rows=flush_rows)

    grid = (core_split, tiles_per_core)
    out = pl.pallas_call(
        kernel,
        out_shape=jax.ShapeDtypeStruct((core_split, m_pad, 1), jnp.float32),
        grid=grid,
        in_specs=[
            pl.BlockSpec(memory_space=pltpu.SMEM),                       # [stddev, mean]
            pl.BlockSpec((rows_per_tile, 128),
                         lambda c, t: (c * tiles_per_core + t, 0)),      # x tile
            pl.BlockSpec((rows_per_tile, 128),
                         lambda c, t: (c * tiles_per_core + t, 0)),      # idx tile
        ],
        # One private partial result per core; written once at its last atom tile.
        out_specs=pl.BlockSpec((1, m_pad, 1), lambda c, t: (c, 0, 0)),
        scratch_shapes=[pltpu.VMEM((m_pad, 128), jnp.float32)],
        compiler_params=pltpu.CompilerParams(
            dimension_semantics=("parallel", "arbitrary")),
    )(scale, x_dense, idx_dense)

    # Combine the per-core partials and strip molecule padding.
    return out.sum(axis=0)[:num_molecules, 0]


if __name__ == "__main__":
    key = jax.random.PRNGKey(0)
    k1, k2, k3 = jax.random.split(key, 3)

    # --- Test 1: canonical small example, default buffers (mean=0, std=1) ---
    nr_of_atoms = 12
    nr_of_molecules = 3
    x = jax.random.normal(k1, (nr_of_atoms, 1), dtype=jnp.float32)
    atomic_subsystem_indices = jnp.asarray(
        [0, 0, 0, 0, 1, 1, 1, 1, 2, 2, 2, 2], dtype=jnp.int32)

    result = from_atom_to_molecule_reduction(
        x, atomic_subsystem_indices, num_molecules=nr_of_molecules)
    result = jax.block_until_ready(result)

    ref = jax.ops.segment_sum(x.reshape(-1), atomic_subsystem_indices,
                              num_segments=nr_of_molecules)
    np.testing.assert_allclose(np.asarray(result), np.asarray(ref),
                               rtol=1e-6, atol=1e-6)

    # --- Test 2: larger, shuffled indices, non-trivial affine, both core splits ---
    n_atoms2, n_mol2 = 5000, 37
    mean2, std2 = 0.25, 1.5
    x2 = jax.random.normal(k2, (n_atoms2, 1), dtype=jnp.float32)
    idx2 = jax.random.randint(k3, (n_atoms2,), 0, n_mol2, dtype=jnp.int32)

    result2 = from_atom_to_molecule_reduction(
        x2, idx2, num_molecules=n_mol2, e_i_mean=mean2, e_i_stddev=std2)
    result2 = jax.block_until_ready(result2)

    ref2 = jax.ops.segment_sum(x2.reshape(-1) * std2 + mean2, idx2,
                               num_segments=n_mol2)
    np.testing.assert_allclose(np.asarray(result2), np.asarray(ref2),
                               rtol=1e-5, atol=1e-3)

    print("KERNEL_OK")
</pallas_src>

<mosaic_0001>
module attributes {stable_mosaic.version = 11 : i64} {
  func.func @_reduce_kernel(%arg0: i32, %arg1: i32, %arg2: memref<2xf32, #tpu.memory_space<smem>>, %arg3: memref<8x128xf32, #tpu.memory_space<vmem>>, %arg4: memref<8x128xi32, #tpu.memory_space<vmem>>, %arg5: memref<1x8x1xf32, #tpu.memory_space<vmem>>, %arg6: memref<8x128xf32, #tpu.memory_space<vmem>>) attributes {dimension_semantics = [#tpu.dimension_semantics<parallel>, #tpu.dimension_semantics<arbitrary>], iteration_bounds = array<i64: 2, 1>, scalar_prefetch = 0 : i64, scratch_operands = 1 : i64, tpu.core_type = #tpu.core_type<tc>, window_params = [{transform_indices = @transform_0, window_bounds = array<i64: 2>}, {transform_indices = @transform_1, window_bounds = array<i64: 8, 128>}, {transform_indices = @transform_2, window_bounds = array<i64: 8, 128>}, {transform_indices = @transform_3, window_bounds = array<i64: 1, 8, 1>}]} {
    %c0_i32 = arith.constant 0 : i32
    %0 = arith.cmpi eq, %arg1, %c0_i32 : i32
    %1 = arith.extui %0 : i1 to i32
    %c0_i32_0 = arith.constant 0 : i32
    %2 = arith.cmpi ne, %1, %c0_i32_0 : i32
    scf.if %2 {
      %cst_41 = arith.constant 0.000000e+00 : f32
      %117 = vector.broadcast %cst_41 : f32 to vector<8x128xf32>
      %c0_42 = arith.constant 0 : index
      %c0_43 = arith.constant 0 : index
      %118 = vector.load %arg6[%c0_42, %c0_43] : memref<8x128xf32, #tpu.memory_space<vmem>>, vector<8x128xf32>
      tpu.vector_store %arg6[%c0_42, %c0_43], %117 {strides = array<i32>} : memref<8x128xf32, #tpu.memory_space<vmem>>, vector<8x128xf32>,
    } else {
    }
    %c0 = arith.constant 0 : index
    %3 = memref.load %arg2[%c0] : memref<2xf32, #tpu.memory_space<smem>>
    %c1 = arith.constant 1 : index
    %4 = memref.load %arg2[%c1] : memref<2xf32, #tpu.memory_space<smem>>
    %5 = tpu.iota {dimensions = array<i32: 0>} : vector<8x128xi32>
    %c0_i32_1 = arith.constant 0 : i32
    %6 = vector.broadcast %c0_i32_1 : i32 to vector<8x128xi32>
    %7 = arith.addi %5, %6 : vector<8x128xi32>
    %c0_2 = arith.constant 0 : index
    %c0_3 = arith.constant 0 : index
    %8 = vector.load %arg3[%c0_2, %c0_3] : memref<8x128xf32, #tpu.memory_space<vmem>>, vector<1x128xf32>
    %9 = vector.broadcast %3 : f32 to vector<1x128xf32>
    %10 = arith.mulf %8, %9 : vector<1x128xf32>
    %11 = vector.broadcast %4 : f32 to vector<1x128xf32>
    %12 = arith.addf %10, %11 : vector<1x128xf32>
    %c0_4 = arith.constant 0 : index
    %c0_5 = arith.constant 0 : index
    %13 = vector.load %arg4[%c0_4, %c0_5] : memref<8x128xi32, #tpu.memory_space<vmem>>, vector<1x128xi32>
    %14 = vector.broadcast %13 : vector<1x128xi32> to vector<8x128xi32>
    %15 = arith.cmpi eq, %14, %7 : vector<8x128xi32>
    %cst = arith.constant 0.000000e+00 : f32
    %16 = vector.shape_cast %12 : vector<1x128xf32> to vector<1x128xf32>
    %17 = vector.broadcast %16 : vector<1x128xf32> to vector<8x128xf32>
    %18 = vector.broadcast %cst : f32 to vector<8x128xf32>
    %19 = arith.select %15, %17, %18 : vector<8x128xi1>, vector<8x128xf32>
    %c1_6 = arith.constant 1 : index
    %c0_7 = arith.constant 0 : index
    %20 = vector.load %arg3[%c1_6, %c0_7] : memref<8x128xf32, #tpu.memory_space<vmem>>, vector<1x128xf32>
    %21 = vector.broadcast %3 : f32 to vector<1x128xf32>
    %22 = arith.mulf %20, %21 : vector<1x128xf32>
    %23 = vector.broadcast %4 : f32 to vector<1x128xf32>
    %24 = arith.addf %22, %23 : vector<1x128xf32>
    %c1_8 = arith.constant 1 : index
    %c0_9 = arith.constant 0 : index
    %25 = vector.load %arg4[%c1_8, %c0_9] : memref<8x128xi32, #tpu.memory_space<vmem>>, vector<1x128xi32>
    %26 = vector.broadcast %25 : vector<1x128xi32> to vector<8x128xi32>
    %27 = arith.cmpi eq, %26, %7 : vector<8x128xi32>
    %cst_10 = arith.constant 0.000000e+00 : f32
    %28 = vector.shape_cast %24 : vector<1x128xf32> to vector<1x128xf32>
    %29 = vector.broadcast %28 : vector<1x128xf32> to vector<8x128xf32>
    %30 = vector.broadcast %cst_10 : f32 to vector<8x128xf32>
    %31 = arith.select %27, %29, %30 : vector<8x128xi1>, vector<8x128xf32>
    %32 = arith.addf %19, %31 : vector<8x128xf32>
    %c2 = arith.constant 2 : index
    %c0_11 = arith.constant 0 : index
    %33 = vector.load %arg3[%c2, %c0_11] : memref<8x128xf32, #tpu.memory_space<vmem>>, vector<1x128xf32>
    %34 = vector.broadcast %3 : f32 to vector<1x128xf32>
    %35 = arith.mulf %33, %34 : vector<1x128xf32>
    %36 = vector.broadcast %4 : f32 to vector<1x128xf32>
    %37 = arith.addf %35, %36 : vector<1x128xf32>
    %c2_12 = arith.constant 2 : index
    %c0_13 = arith.constant 0 : index
    %38 = vector.load %arg4[%c2_12, %c0_13] : memref<8x128xi32, #tpu.memory_space<vmem>>, vector<1x128xi32>
    %39 = vector.broadcast %38 : vector<1x128xi32> to vector<8x128xi32>
    %40 = arith.cmpi eq, %39, %7 : vector<8x128xi32>
    %cst_14 = arith.constant 0.000000e+00 : f32
    %41 = vector.shape_cast %37 : vector<1x128xf32> to vector<1x128xf32>
    %42 = vector.broadcast %41 : vector<1x128xf32> to vector<8x128xf32>
    %43 = vector.broadcast %cst_14 : f32 to vector<8x128xf32>
    %44 = arith.select %40, %42, %43 : vector<8x128xi1>, vector<8x128xf32>
    %45 = arith.addf %32, %44 : vector<8x128xf32>
    %c3 = arith.constant 3 : index
    %c0_15 = arith.constant 0 : index
    %46 = vector.load %arg3[%c3, %c0_15] : memref<8x128xf32, #tpu.memory_space<vmem>>, vector<1x128xf32>
    %47 = vector.broadcast %3 : f32 to vector<1x128xf32>
    %48 = arith.mulf %46, %47 : vector<1x128xf32>
    %49 = vector.broadcast %4 : f32 to vector<1x128xf32>
    %50 = arith.addf %48, %49 : vector<1x128xf32>
    %c3_16 = arith.constant 3 : index
    %c0_17 = arith.constant 0 : index
    %51 = vector.load %arg4[%c3_16, %c0_17] : memref<8x128xi32, #tpu.memory_space<vmem>>, vector<1x128xi32>
    %52 = vector.broadcast %51 : vector<1x128xi32> to vector<8x128xi32>
    %53 = arith.cmpi eq, %52, %7 : vector<8x128xi32>
    %cst_18 = arith.constant 0.000000e+00 : f32
    %54 = vector.shape_cast %50 : vector<1x128xf32> to vector<1x128xf32>
    %55 = vector.broadcast %54 : vector<1x128xf32> to vector<8x128xf32>
    %56 = vector.broadcast %cst_18 : f32 to vector<8x128xf32>
    %57 = arith.select %53, %55, %56 : vector<8x128xi1>, vector<8x128xf32>
    %58 = arith.addf %45, %57 : vector<8x128xf32>
    %c4 = arith.constant 4 : index
    %c0_19 = arith.constant 0 : index
    %59 = vector.load %arg3[%c4, %c0_19] : memref<8x128xf32, #tpu.memory_space<vmem>>, vector<1x128xf32>
    %60 = vector.broadcast %3 : f32 to vector<1x128xf32>
    %61 = arith.mulf %59, %60 : vector<1x128xf32>
    %62 = vector.broadcast %4 : f32 to vector<1x128xf32>
    %63 = arith.addf %61, %62 : vector<1x128xf32>
    %c4_20 = arith.constant 4 : index
    %c0_21 = arith.constant 0 : index
    %64 = vector.load %arg4[%c4_20, %c0_21] : memref<8x128xi32, #tpu.memory_space<vmem>>, vector<1x128xi32>
    %65 = vector.broadcast %64 : vector<1x128xi32> to vector<8x128xi32>
    %66 = arith.cmpi eq, %65, %7 : vector<8x128xi32>
    %cst_22 = arith.constant 0.000000e+00 : f32
    %67 = vector.shape_cast %63 : vector<1x128xf32> to vector<1x128xf32>
    %68 = vector.broadcast %67 : vector<1x128xf32> to vector<8x128xf32>
    %69 = vector.broadcast %cst_22 : f32 to vector<8x128xf32>
    %70 = arith.select %66, %68, %69 : vector<8x128xi1>, vector<8x128xf32>
    %71 = arith.addf %58, %70 : vector<8x128xf32>
    %c5 = arith.constant 5 : index
    %c0_23 = arith.constant 0 : index
    %72 = vector.load %arg3[%c5, %c0_23] : memref<8x128xf32, #tpu.memory_space<vmem>>, vector<1x128xf32>
    %73 = vector.broadcast %3 : f32 to vector<1x128xf32>
    %74 = arith.mulf %72, %73 : vector<1x128xf32>
    %75 = vector.broadcast %4 : f32 to vector<1x128xf32>
    %76 = arith.addf %74, %75 : vector<1x128xf32>
    %c5_24 = arith.constant 5 : index
    %c0_25 = arith.constant 0 : index
    %77 = vector.load %arg4[%c5_24, %c0_25] : memref<8x128xi32, #tpu.memory_space<vmem>>, vector<1x128xi32>
    %78 = vector.broadcast %77 : vector<1x128xi32> to vector<8x128xi32>
    %79 = arith.cmpi eq, %78, %7 : vector<8x128xi32>
    %cst_26 = arith.constant 0.000000e+00 : f32
    %80 = vector.shape_cast %76 : vector<1x128xf32> to vector<1x128xf32>
    %81 = vector.broadcast %80 : vector<1x128xf32> to vector<8x128xf32>
    %82 = vector.broadcast %cst_26 : f32 to vector<8x128xf32>
    %83 = arith.select %79, %81, %82 : vector<8x128xi1>, vector<8x128xf32>
    %84 = arith.addf %71, %83 : vector<8x128xf32>
    %c6 = arith.constant 6 : index
    %c0_27 = arith.constant 0 : index
    %85 = vector.load %arg3[%c6, %c0_27] : memref<8x128xf32, #tpu.memory_space<vmem>>, vector<1x128xf32>
    %86 = vector.broadcast %3 : f32 to vector<1x128xf32>
    %87 = arith.mulf %85, %86 : vector<1x128xf32>
    %88 = vector.broadcast %4 : f32 to vector<1x128xf32>
    %89 = arith.addf %87, %88 : vector<1x128xf32>
    %c6_28 = arith.constant 6 : index
    %c0_29 = arith.constant 0 : index
    %90 = vector.load %arg4[%c6_28, %c0_29] : memref<8x128xi32, #tpu.memory_space<vmem>>, vector<1x128xi32>
    %91 = vector.broadcast %90 : vector<1x128xi32> to vector<8x128xi32>
    %92 = arith.cmpi eq, %91, %7 : vector<8x128xi32>
    %cst_30 = arith.constant 0.000000e+00 : f32
    %93 = vector.shape_cast %89 : vector<1x128xf32> to vector<1x128xf32>
    %94 = vector.broadcast %93 : vector<1x128xf32> to vector<8x128xf32>
    %95 = vector.broadcast %cst_30 : f32 to vector<8x128xf32>
    %96 = arith.select %92, %94, %95 : vector<8x128xi1>, vector<8x128xf32>
    %97 = arith.addf %84, %96 : vector<8x128xf32>
    %c7 = arith.constant 7 : index
    %c0_31 = arith.constant 0 : index
    %98 = vector.load %arg3[%c7, %c0_31] : memref<8x128xf32, #tpu.memory_space<vmem>>, vector<1x128xf32>
    %99 = vector.broadcast %3 : f32 to vector<1x128xf32>
    %100 = arith.mulf %98, %99 : vector<1x128xf32>
    %101 = vector.broadcast %4 : f32 to vector<1x128xf32>
    %102 = arith.addf %100, %101 : vector<1x128xf32>
    %c7_32 = arith.constant 7 : index
    %c0_33 = arith.constant 0 : index
    %103 = vector.load %arg4[%c7_32, %c0_33] : memref<8x128xi32, #tpu.memory_space<vmem>>, vector<1x128xi32>
    %104 = vector.broadcast %103 : vector<1x128xi32> to vector<8x128xi32>
    %105 = arith.cmpi eq, %104, %7 : vector<8x128xi32>
    %cst_34 = arith.constant 0.000000e+00 : f32
    %106 = vector.shape_cast %102 : vector<1x128xf32> to vector<1x128xf32>
    %107 = vector.broadcast %106 : vector<1x128xf32> to vector<8x128xf32>
    %108 = vector.broadcast %cst_34 : f32 to vector<8x128xf32>
    %109 = arith.select %105, %107, %108 : vector<8x128xi1>, vector<8x128xf32>
    %110 = arith.addf %97, %109 : vector<8x128xf32>
    %c0_35 = arith.constant 0 : index
    %c0_36 = arith.constant 0 : index
    %111 = vector.load %arg6[%c0_35, %c0_36] : memref<8x128xf32, #tpu.memory_space<vmem>>, vector<8x128xf32>
    %112 = arith.addf %111, %110 : vector<8x128xf32>
    %c0_37 = arith.constant 0 : index
    %c0_38 = arith.constant 0 : index
    %113 = vector.load %arg6[%c0_37, %c0_38] : memref<8x128xf32, #tpu.memory_space<vmem>>, vector<8x128xf32>
    tpu.vector_store %arg6[%c0_37, %c0_38], %112 {strides = array<i32>} : memref<8x128xf32, #tpu.memory_space<vmem>>, vector<8x128xf32>,
    %c0_i32_39 = arith.constant 0 : i32
    %114 = arith.cmpi eq, %arg1, %c0_i32_39 : i32
    %115 = arith.extui %114 : i1 to i32
    %c0_i32_40 = arith.constant 0 : i32
    %116 = arith.cmpi ne, %115, %c0_i32_40 : i32
    scf.if %116 {
      %c0_41 = arith.constant 0 : index
      %c0_42 = arith.constant 0 : index
      %117 = vector.load %arg6[%c0_41, %c0_42] : memref<8x128xf32, #tpu.memory_space<vmem>>, vector<8x128xf32>
      %cst_43 = arith.constant dense<0.000000e+00> : vector<8xf32>
      %118 = vector.multi_reduction <add>, %117, %cst_43 [1] : vector<8x128xf32> to vector<8xf32>
      %119 = vector.shape_cast %118 : vector<8xf32> to vector<8x1xf32>
      %c0_44 = arith.constant 0 : index
      %c0_45 = arith.constant 0 : index
      %c0_46 = arith.constant 0 : index
      %120 = vector.load %arg5[%c0_44, %c0_45, %c0_46] : memref<1x8x1xf32, #tpu.memory_space<vmem>>, vector<1x8x1xf32>
      %121 = vector.shape_cast %120 : vector<1x8x1xf32> to vector<8x1xf32>
      %122 = vector.shape_cast %119 : vector<8x1xf32> to vector<1x8x1xf32>
      tpu.vector_store %arg5[%c0_44, %c0_45, %c0_46], %122 {strides = array<i32>} : memref<1x8x1xf32, #tpu.memory_space<vmem>>, vector<1x8x1xf32>,
    } else {
    }
    return
  }
  func.func @transform_0(%arg0: i32, %arg1: i32) -> i32 {
    %c0_i32 = arith.constant 0 : i32
    %c0_i32_0 = arith.constant 0 : i32
    return %c0_i32 : i32
  }
  func.func @transform_1(%arg0: i32, %arg1: i32) -> (i32, i32) {
    %c1_i32 = arith.constant 1 : i32
    %0 = arith.muli %arg0, %c1_i32 : i32
    %1 = arith.addi %0, %arg1 : i32
    %c0_i32 = arith.constant 0 : i32
    %c0_i32_0 = arith.constant 0 : i32
    return %1, %c0_i32 : i32, i32
  }
  func.func @transform_2(%arg0: i32, %arg1: i32) -> (i32, i32) {
    %c1_i32 = arith.constant 1 : i32
    %0 = arith.muli %arg0, %c1_i32 : i32
    %1 = arith.addi %0, %arg1 : i32
    %c0_i32 = arith.constant 0 : i32
    %c0_i32_0 = arith.constant 0 : i32
    return %1, %c0_i32 : i32, i32
  }
  func.func @transform_3(%arg0: i32, %arg1: i32) -> (i32, i32, i32) {
    %c0_i32 = arith.constant 0 : i32
    %c0_i32_0 = arith.constant 0 : i32
    %c0_i32_1 = arith.constant 0 : i32
    return %arg0, %c0_i32, %c0_i32_0 : i32, i32, i32
  }
}

</mosaic_0001>

<llo_original>
// kernel: tpu_custom_call.1
$region0: #{tpu_custom_call.1}
  #allocation0 [shape = 'u32[]', space=smem, size = 0x4, offset = 0x4, fixed_abs, tag = 'smem constant byte address 0x4 - core index']
  #allocation1 [shape = 'u32[144,128]{1,0:T(1,128)}', space=vmem, size = 0x12000, scoped, tag = 'internal scratch']
  #allocation2 [shape = 'f32[8,128]{1,0:T(8,128)}', space=vmem, size = 0x1000, scoped, tag = 'scratch operand']
  %s0 = inlined_call_operand.hbm [shape: f32[2], index: 0, kind: input, shape index: {}]
  %s1 = inlined_call_operand.hbm [shape: f32[16,128], index: 1, kind: input, shape index: {}]
  %s2 = inlined_call_operand.hbm [shape: s32[16,128], index: 2, kind: input, shape index: {}]
  %s3 = inlined_call_operand.vmem [shape: f32[2,8,1], index: 3, kind: output, shape index: {}]
  %s4 = sld [smem:[#allocation0]]
  $region65: #{tpu_custom_call.1} parent=0
    _
  %s6 = ssub.s32 1, %s4
  %s7 = scalar_select 0, %s6, %s4
  $region1: #{tpu_custom_call.1} parent=0
    #allocation3 [shape = 'u8[512]{0}', space=smem, size = 0x200, scoped, tag = 'input window, operand 0, single buffered']
    #allocation4 [shape = 's32[2]{0}', space=sflag, size = 0x8, scoped, tag = 'scoped memory for tpu_custom_call.1']
    #allocation5 [shape = 's32[2]{0}', space=sflag, size = 0x8, scoped, tag = 'scoped memory for tpu_custom_call.1']
    #allocation6 [shape = 'u8[8192]{0}', space=vmem, size = 0x2000, scoped, tag = 'input window, operand 1']
    #allocation7 [shape = 'u8[8192]{0}', space=vmem, size = 0x2000, scoped, tag = 'input window, operand 2']
    #allocation8 [shape = 's32[2]{0}', space=sflag, size = 0x8, scoped, tag = 'scoped memory for tpu_custom_call.1']
    %8 = vsyncpa [#allocation5], 0
    %9 = vsyncpa [#allocation4], 0
    %s10 = scalar_lea.sflag [#allocation4], 1
    %11 = vsyncpa %s10, 0
    %12 = vsyncpa [#allocation8], 0
    %s13 = scalar_lea.sflag [#allocation8], 1
    %14 = vsyncpa %s13, 0
    loop: start=0, step=1, limit=4
    $region2: #{tpu_custom_call.1} parent=1 // loop_pre_header
      _
    $region3: #{tpu_custom_call.1} parent=1 // loop_header
      %s16 = sphi 0, %s20
      %p17 = scmp.ge.s32.totalorder %s16, 4
      %s23 = sphi 0, %s35
      %s24 = sphi 0, %s31
      %s25 = sphi 0, %s23
      %s26 = sphi 0, %s24
      %s27 = sphi 0, %s25
      %s28 = sphi 0, %s26
      %s36 = sphi 0, %s36
      %s38 = sphi 0, %s36
      %s39 = sphi 0, %s38
      %s53 = sphi 0, %s39
      %s61 = sphi 0, %s63
      %s64 = sphi 0, %s61
      %s65 = sphi 0, %s64
      %s81 = sphi 0, %s65
      %s89 = sphi 0, %s91
      %s92 = sphi 0, %s89
      %s93 = sphi 0, %s92
      %s109 = sphi 0, %s93
      %s115 = sphi 0, %s117
      %s118 = sphi 0, %s115
      %s119 = sphi 0, %s118
      %s135 = sphi 0, %s119
    $region4: #{tpu_custom_call.1} parent=1 // loop_header_branch
      %19 = sbr.rel (%p17) target = $region8
    $region5: #{tpu_custom_call.1} parent=1 // loop_body
      %s21 = ssub.s32 %s16, 1
      %s22 = ssub.s32 %s16, 2
      %s29 = sadd.s32 1, %s24
      %p30 = scmp.ge.s32.totalorder %s29, 1
      %s31 = scalar_select %p30, 0, %s29
      %s32 = sadd.s32 1, %s23
      %s33 = scalar_select %p30, %s32, %s23
      %p34 = scmp.ge.s32.totalorder %s33, 2
      %s35 = scalar_select %p34, 0, %s33
      %s37 = sadd.s32 %s36, 1
      %p40 = scmp.eq.s32.totalorder %s16, 1
      %p41 = scmp.ne.s32.totalorder %s36, %s38
      %p42 = scmp.eq.s32.totalorder %s16, 0
      %p43 = por %p41, %p42
      %p44 = scmp.ne.s32.totalorder %s36, %s38
      %p45 = scmp.eq.s32.totalorder %s21, 1
      %p46 = por %p44, %p45
      %p47 = scmp.ne.s32.totalorder %s38, %s39
      %p48 = scmp.eq.s32.totalorder %s21, 0
      %p49 = por %p47, %p48
      %p50 = scmp.ne.s32.totalorder %s38, %s39
      %p51 = scmp.eq.s32.totalorder %s22, 1
      %p52 = por %p50, %p51
      %p54 = scmp.ne.s32.totalorder %s39, %s53
      %p55 = scmp.eq.s32.totalorder %s22, 0
      %p56 = por %p54, %p55
      %s57 = sadd.s32 %s23, %s24
      %s58 = sadd.s32 %s35, %s31
      %s59 = ssub.s32 %s57, %s58
      %p60 = scmp.eq.s32.totalorder %s59, 0
      %s62 = sadd.s32 %s61, 1
      %s63 = scalar_select %p60, %s61, %s62
      %p66 = pneg %p60
      %p67 = scmp.eq.s32.totalorder %s16, 1
      %p68 = por %p66, %p67
      %p69 = scmp.ne.s32.totalorder %s61, %s64
      %p70 = scmp.eq.s32.totalorder %s16, 0
      %p71 = por %p69, %p70
      %p72 = scmp.ne.s32.totalorder %s61, %s64
      %p73 = scmp.eq.s32.totalorder %s21, 1
      %p74 = por %p72, %p73
      %p75 = scmp.ne.s32.totalorder %s64, %s65
      %p76 = scmp.eq.s32.totalorder %s21, 0
      %p77 = por %p75, %p76
      %p78 = scmp.ne.s32.totalorder %s64, %s65
      %p79 = scmp.eq.s32.totalorder %s22, 1
      %p80 = por %p78, %p79
      %p82 = scmp.ne.s32.totalorder %s65, %s81
      %p83 = scmp.eq.s32.totalorder %s22, 0
      %p84 = por %p82, %p83
      %s85 = sadd.s32 %s23, %s24
      %s86 = sadd.s32 %s35, %s31
      %s87 = ssub.s32 %s85, %s86
      %p88 = scmp.eq.s32.totalorder %s87, 0
      %s90 = sadd.s32 %s89, 1
      %s91 = scalar_select %p88, %s89, %s90
      %p94 = pneg %p88
      %p95 = scmp.eq.s32.totalorder %s16, 1
      %p96 = por %p94, %p95
      %p97 = scmp.ne.s32.totalorder %s89, %s92
      %p98 = scmp.eq.s32.totalorder %s16, 0
      %p99 = por %p97, %p98
      %p100 = scmp.ne.s32.totalorder %s89, %s92
      %p101 = scmp.eq.s32.totalorder %s21, 1
      %p102 = por %p100, %p101
      %p103 = scmp.ne.s32.totalorder %s92, %s93
      %p104 = scmp.eq.s32.totalorder %s21, 0
      %p105 = por %p103, %p104
      %p106 = scmp.ne.s32.totalorder %s92, %s93
      %p107 = scmp.eq.s32.totalorder %s22, 1
      %p108 = por %p106, %p107
      %p110 = scmp.ne.s32.totalorder %s93, %s109
      %p111 = scmp.eq.s32.totalorder %s22, 0
      %p112 = por %p110, %p111
      %s113 = ssub.s32 %s23, %s35
      %p114 = scmp.eq.s32.totalorder %s113, 0
      %s116 = sadd.s32 %s115, 1
      %s117 = scalar_select %p114, %s115, %s116
      %p120 = pneg %p114
      %p121 = scmp.eq.s32.totalorder %s16, 1
      %p122 = por %p120, %p121
      %p123 = scmp.ne.s32.totalorder %s115, %s118
      %p124 = scmp.eq.s32.totalorder %s16, 0
      %p125 = por %p123, %p124
      %p126 = scmp.ne.s32.totalorder %s115, %s118
      %p127 = scmp.eq.s32.totalorder %s21, 1
      %p128 = por %p126, %p127
      %p129 = scmp.ne.s32.totalorder %s118, %s119
      %p130 = scmp.eq.s32.totalorder %s21, 0
      %p131 = por %p129, %p130
      %p132 = scmp.ne.s32.totalorder %s118, %s119
      %p133 = scmp.eq.s32.totalorder %s22, 1
      %p134 = por %p132, %p133
      %p136 = scmp.ne.s32.totalorder %s119, %s135
      %p137 = scmp.eq.s32.totalorder %s22, 0
      %p138 = por %p136, %p137
      %p139 = scmp.le.s32.totalorder 1, %s16
      %p140 = scmp.lt.s32.totalorder %s16, 3
      %p141 = pnand %p139, %p140
      %p142 = pneg %p141
      // Predicated region
      $region9: #{tpu_custom_call.1} parent=5 // pred_check
        _
      $region10: #{tpu_custom_call.1} parent=5 // pred_check_branch
        %144 = sbr.rel (%p141) target = $region12
      $region11: #{tpu_custom_call.1} parent=5 // pred_region
        %s145 = ssub.s32 %s16, 1
        // Predicated region
        $region13: #{tpu_custom_call.1} parent=11 // pred_check
          %p146 = pneg %p49
        $region14: #{tpu_custom_call.1} parent=11 // pred_check_branch
          %148 = sbr.rel (%p146) target = $region16
        $region15: #{tpu_custom_call.1} parent=11 // pred_region
          %s150 = ssub.s32 16, 16
          %151 = vsyncadd [#allocation5], %s150
          %154 = dma.hbm_to_smem %s0, 16, [#allocation3], [#allocation5]
        $region16: #{tpu_custom_call.1} parent=11 // pred_fallthru
          _
      $region12: #{tpu_custom_call.1} parent=5 // pred_fallthru
        _
      %p155 = scmp.lt.s32.totalorder %s16, 2
      // Predicated region
      $region17: #{tpu_custom_call.1} parent=5 // pred_check
        %p156 = pneg %p155
      $region18: #{tpu_custom_call.1} parent=5 // pred_check_branch
        %158 = sbr.rel (%p156) target = $region20
      $region19: #{tpu_custom_call.1} parent=5 // pred_region
        // Predicated region
        $region21: #{tpu_custom_call.1} parent=19 // pred_check
          %p159 = pneg %p71
        $region22: #{tpu_custom_call.1} parent=19 // pred_check_branch
          %161 = sbr.rel (%p159) target = $region24
        $region23: #{tpu_custom_call.1} parent=19 // pred_region
          %s162 = sand.u32 %s61, 1
          %s163 = scalar_lea.sflag [#allocation4], %s162
          %s164 = sand.u32 %s61, 1
          %s165 = smul.addr %s164, 8
          %s166 = scalar_lea.vmem [#allocation6], %s165
          %s167 = sadd.s32 %s23, %s24
          %s169 = ssub.s32 128, 128
          %170 = vsyncadd %s163, %s169
          %s171 = smul.addr %s167, 128
          %s172 = scalar_lea.hbm %s1, %s171
          %s174 = sshll.u32 %s166, 4
          %s175 = int_to_ptr.vmem [resolvable:$true] %s174
          %177 = dma.hbm_to_vmem [thread:$0]  %s172, 128, %s175, %s163
        $region24: #{tpu_custom_call.1} parent=19 // pred_fallthru
          _
        // Predicated region
        $region25: #{tpu_custom_call.1} parent=19 // pred_check
          %p178 = pneg %p99
        $region26: #{tpu_custom_call.1} parent=19 // pred_check_branch
          %180 = sbr.rel (%p178) target = $region28
        $region27: #{tpu_custom_call.1} parent=19 // pred_region
          %s181 = sand.u32 %s89, 1
          %s182 = scalar_lea.sflag [#allocation8], %s181
          %s183 = sand.u32 %s89, 1
          %s184 = smul.addr %s183, 8
          %s185 = scalar_lea.vmem [#allocation7], %s184
          %s186 = sadd.s32 %s23, %s24
          %s188 = ssub.s32 128, 128
          %189 = vsyncadd %s182, %s188
          %s190 = smul.addr %s186, 128
          %s191 = scalar_lea.hbm %s2, %s190
          %s193 = sshll.u32 %s185, 4
          %s194 = int_to_ptr.vmem [resolvable:$true] %s193
          %196 = dma.hbm_to_vmem [thread:$0]  %s191, 128, %s194, %s182
        $region28: #{tpu_custom_call.1} parent=19 // pred_fallthru
          _
      $region20: #{tpu_custom_call.1} parent=5 // pred_fallthru
        _
      %p197 = scmp.le.s32.totalorder 1, %s16
      %p198 = scmp.lt.s32.totalorder %s16, 3
      %p199 = pnand %p197, %p198
      %p200 = pneg %p199
      // Predicated region
      $region29: #{tpu_custom_call.1} parent=5 // pred_check
        _
      $region30: #{tpu_custom_call.1} parent=5 // pred_check_branch
        %202 = sbr.rel (%p199) target = $region32
      $region31: #{tpu_custom_call.1} parent=5 // pred_region
        %s203 = ssub.s32 %s16, 1
        // Predicated region
        $region33: #{tpu_custom_call.1} parent=31 // pred_check
          %p204 = pneg %p49
        $region34: #{tpu_custom_call.1} parent=31 // pred_check_branch
          %206 = sbr.rel (%p204) target = $region36
        $region35: #{tpu_custom_call.1} parent=31 // pred_region
          %207 = dma.done [#allocation5], 16
        $region36: #{tpu_custom_call.1} parent=31 // pred_fallthru
          _
        %s208 = sand.u32 %s64, 1
        %s209 = scalar_lea.sflag [#allocation4], %s208
        %s210 = sand.u32 %s64, 1
        %s211 = smul.addr %s210, 8
        %s212 = scalar_lea.vmem [#allocation6], %s211
        // Predicated region
        $region37: #{tpu_custom_call.1} parent=31 // pred_check
          %p213 = pneg %p77
        $region38: #{tpu_custom_call.1} parent=31 // pred_check_branch
          %215 = sbr.rel (%p213) target = $region40
        $region39: #{tpu_custom_call.1} parent=31 // pred_region
          %216 = dma.done %s209, 128
        $region40: #{tpu_custom_call.1} parent=31 // pred_fallthru
          _
        %s217 = sand.u32 %s92, 1
        %s218 = scalar_lea.sflag [#allocation8], %s217
        %s219 = sand.u32 %s92, 1
        %s220 = smul.addr %s219, 8
        %s221 = scalar_lea.vmem [#allocation7], %s220
        // Predicated region
        $region41: #{tpu_custom_call.1} parent=31 // pred_check
          %p222 = pneg %p105
        $region42: #{tpu_custom_call.1} parent=31 // pred_check_branch
          %224 = sbr.rel (%p222) target = $region44
        $region43: #{tpu_custom_call.1} parent=31 // pred_region
          %225 = dma.done %s218, 128
        $region44: #{tpu_custom_call.1} parent=31 // pred_fallthru
          _
        %226 = sfence
        %p227 = pneg %p49
        %p228 = pneg %p46
        %s229 = sand.u32 %s64, 1
        %s230 = scalar_lea.sflag [#allocation4], %s229
        %s231 = sand.u32 %s64, 1
        %s232 = smul.addr %s231, 8
        %s233 = scalar_lea.vmem [#allocation6], %s232
        %p234 = pneg %p77
        %p235 = pneg %p74
        %s236 = sand.u32 %s92, 1
        %s237 = scalar_lea.sflag [#allocation8], %s236
        %s238 = sand.u32 %s92, 1
        %s239 = smul.addr %s238, 8
        %s240 = scalar_lea.vmem [#allocation7], %s239
        %p241 = pneg %p105
        %p242 = pneg %p102
        %p243 = pneg %p131
        %p244 = pneg %p128
        %p245 = scmp.lt.s32.totalorder %s25, 1
        %s246 = scalar_select %p245, %s25, 1
        %s247 = smul.addr %s246, 8
        %s248 = scalar_lea.vmem %s3, %s247
        %s249 = sadd.s32 %s25, %s26
        %s250 = sadd.s32 %s25, %s26
        %p251 = scmp.lt.s32.totalorder %s25, 1
        %s252 = scalar_select %p251, %s25, 1
        %s253 = smul.addr %s252, 8
        %s254 = scalar_lea.vmem %s3, %s253
        %p255 = scmp.eq.s32.totalorder %s26, 0
        // Predicated region
        $region45: #{tpu_custom_call.1} parent=31 // pred_check
          %p256 = pneg %p255
        $region46: #{tpu_custom_call.1} parent=31 // pred_check_branch
          %258 = sbr.rel (%p256) target = $region48
        $region47: #{tpu_custom_call.1} parent=31 // pred_region
          %259 = vst [vmem:[#allocation2] sm:$0xff] 0.0
        $region48: #{tpu_custom_call.1} parent=31 // pred_fallthru
          _
        %s260 = sld [smem:[#allocation3]]
        %s261 = sld [smem:[#allocation3 + $0x1]]
        %v262 = vlaneseq
        %v263 = vshrl.u32 %v262, 7
        %v264 = vld [vmem:[%s212] sm:$0x1]
        %v265 = vstv %s260
        %v266 = vmul.f32 %v264, %v265
        %v267 = vstv %s261
        %v268 = vadd.f32 %v266, %v267
        %v269 = vld [vmem:[%s221] sm:$0x1]
        %v270 = vlaneseq
        %v271 = vshrl.u32 %v270, 7
        %v272 = vsub.s32 0, %v271
        %v273 = vrot.slane %v269, %v272
        %vm274 = vcmp.eq.s32.totalorder %v273, %v263
        %v275 = vlaneseq
        %v276 = vshrl.u32 %v275, 7
        %v277 = vsub.s32 0, %v276
        %v278 = vrot.slane %v268, %v277
        %v279 = vsel %vm274, %v278, 0.0
        %v280 = vld [vmem:[%s212 + $0x1] sm:$0x1]
        %v281 = vmul.f32 %v280, %v265
        %v282 = vadd.f32 %v281, %v267
        %v283 = vld [vmem:[%s221 + $0x1] sm:$0x1]
        %v284 = vlaneseq
        %v285 = vshrl.u32 %v284, 7
        %v286 = vsub.s32 0, %v285
        %v287 = vrot.slane %v283, %v286
        %vm288 = vcmp.eq.s32.totalorder %v287, %v263
        %v289 = vlaneseq
        %v290 = vshrl.u32 %v289, 7
        %v291 = vsub.s32 0, %v290
        %v292 = vrot.slane %v282, %v291
        %v293 = vsel %vm288, %v292, 0.0
        %v294 = vadd.f32 %v279, %v293
        %v295 = vld [vmem:[%s212 + $0x2] sm:$0x1]
        %v296 = vmul.f32 %v295, %v265
        %v297 = vadd.f32 %v296, %v267
        %v298 = vld [vmem:[%s221 + $0x2] sm:$0x1]
        %v299 = vlaneseq
        %v300 = vshrl.u32 %v299, 7
        %v301 = vsub.s32 0, %v300
        %v302 = vrot.slane %v298, %v301
        %vm303 = vcmp.eq.s32.totalorder %v302, %v263
        %v304 = vlaneseq
        %v305 = vshrl.u32 %v304, 7
        %v306 = vsub.s32 0, %v305
        %v307 = vrot.slane %v297, %v306
        %v308 = vsel %vm303, %v307, 0.0
        %v309 = vadd.f32 %v294, %v308
        %v310 = vld [vmem:[%s212 + $0x3] sm:$0x1]
        %v311 = vmul.f32 %v310, %v265
        %v312 = vadd.f32 %v311, %v267
        %v313 = vld [vmem:[%s221 + $0x3] sm:$0x1]
        %v314 = vlaneseq
        %v315 = vshrl.u32 %v314, 7
        %v316 = vsub.s32 0, %v315
        %v317 = vrot.slane %v313, %v316
        %vm318 = vcmp.eq.s32.totalorder %v317, %v263
        %v319 = vlaneseq
        %v320 = vshrl.u32 %v319, 7
        %v321 = vsub.s32 0, %v320
        %v322 = vrot.slane %v312, %v321
        %v323 = vsel %vm318, %v322, 0.0
        %v324 = vadd.f32 %v309, %v323
        %v325 = vld [vmem:[%s212 + $0x4] sm:$0x1]
        %v326 = vmul.f32 %v325, %v265
        %v327 = vadd.f32 %v326, %v267
        %v328 = vld [vmem:[%s221 + $0x4] sm:$0x1]
        %v329 = vlaneseq
        %v330 = vshrl.u32 %v329, 7
        %v331 = vsub.s32 0, %v330
        %v332 = vrot.slane %v328, %v331
        %vm333 = vcmp.eq.s32.totalorder %v332, %v263
        %v334 = vlaneseq
        %v335 = vshrl.u32 %v334, 7
        %v336 = vsub.s32 0, %v335
        %v337 = vrot.slane %v327, %v336
        %v338 = vsel %vm333, %v337, 0.0
        %v339 = vadd.f32 %v324, %v338
        %v340 = vld [vmem:[%s212 + $0x5] sm:$0x1]
        %v341 = vmul.f32 %v340, %v265
        %v342 = vadd.f32 %v341, %v267
        %v343 = vld [vmem:[%s221 + $0x5] sm:$0x1]
        %v344 = vlaneseq
        %v345 = vshrl.u32 %v344, 7
        %v346 = vsub.s32 0, %v345
        %v347 = vrot.slane %v343, %v346
        %vm348 = vcmp.eq.s32.totalorder %v347, %v263
        %v349 = vlaneseq
        %v350 = vshrl.u32 %v349, 7
        %v351 = vsub.s32 0, %v350
        %v352 = vrot.slane %v342, %v351
        %v353 = vsel %vm348, %v352, 0.0
        %v354 = vadd.f32 %v339, %v353
        %v355 = vld [vmem:[%s212 + $0x6] sm:$0x1]
        %v356 = vmul.f32 %v355, %v265
        %v357 = vadd.f32 %v356, %v267
        %v358 = vld [vmem:[%s221 + $0x6] sm:$0x1]
        %v359 = vlaneseq
        %v360 = vshrl.u32 %v359, 7
        %v361 = vsub.s32 0, %v360
        %v362 = vrot.slane %v358, %v361
        %vm363 = vcmp.eq.s32.totalorder %v362, %v263
        %v364 = vlaneseq
        %v365 = vshrl.u32 %v364, 7
        %v366 = vsub.s32 0, %v365
        %v367 = vrot.slane %v357, %v366
        %v368 = vsel %vm363, %v367, 0.0
        %v369 = vadd.f32 %v354, %v368
        %v370 = vld [vmem:[%s212 + $0x7] sm:$0x1]
        %v371 = vmul.f32 %v370, %v265
        %v372 = vadd.f32 %v371, %v267
        %v373 = vld [vmem:[%s221 + $0x7] sm:$0x1]
        %v374 = vlaneseq
        %v375 = vshrl.u32 %v374, 7
        %v376 = vsub.s32 0, %v375
        %v377 = vrot.slane %v373, %v376
        %vm378 = vcmp.eq.s32.totalorder %v377, %v263
        %v379 = vlaneseq
        %v380 = vshrl.u32 %v379, 7
        %v381 = vsub.s32 0, %v380
        %v382 = vrot.slane %v372, %v381
        %v383 = vsel %vm378, %v382, 0.0
        %v384 = vadd.f32 %v369, %v383
        %v385 = vld [vmem:[#allocation2] sm:$0xff]
        %v386 = vadd.f32 %v385, %v384
        %387 = vst [vmem:[#allocation2] sm:$0xff] %v386
        // Predicated region
        $region49: #{tpu_custom_call.1} parent=31 // pred_check
          %p388 = pneg %p255
        $region50: #{tpu_custom_call.1} parent=31 // pred_check_branch
          %390 = sbr.rel (%p388) target = $region52
        $region51: #{tpu_custom_call.1} parent=31 // pred_region
          %v391 = vld [vmem:[#allocation2] sm:$0xff]
          %392 = vadd.xlane.f32.xlu0 %v391
          %v393 = vpop.xlane.xlu0 %392
          %vm394 = vcmask 7168
          %395 = vst.msk [vmem:[%s254] sm:$0xff] %vm394, %v393
        $region52: #{tpu_custom_call.1} parent=31 // pred_fallthru
          _
        %p396 = scmp.lt.s32.totalorder %s25, 1
        %s397 = scalar_select %p396, %s25, 1
        %s398 = smul.addr %s397, 8
        %s399 = scalar_lea.vmem %s3, %s398
        // Predicated region
        $region53: #{tpu_custom_call.1} parent=31 // pred_check
          %p400 = pneg %p128
        $region54: #{tpu_custom_call.1} parent=31 // pred_check_branch
          %402 = sbr.rel (%p400) target = $region56
        $region55: #{tpu_custom_call.1} parent=31 // pred_region
          _
        $region56: #{tpu_custom_call.1} parent=31 // pred_fallthru
          _
      $region32: #{tpu_custom_call.1} parent=5 // pred_fallthru
        _
      %p403 = scmp.le.s32.totalorder 2, %s16
      // Predicated region
      $region57: #{tpu_custom_call.1} parent=5 // pred_check
        %p404 = pneg %p403
      $region58: #{tpu_custom_call.1} parent=5 // pred_check_branch
        %406 = sbr.rel (%p404) target = $region60
      $region59: #{tpu_custom_call.1} parent=5 // pred_region
        %s407 = ssub.s32 %s16, 2
        // Predicated region
        $region61: #{tpu_custom_call.1} parent=59 // pred_check
          %p408 = pneg %p134
        $region62: #{tpu_custom_call.1} parent=59 // pred_check_branch
          %410 = sbr.rel (%p408) target = $region64
        $region63: #{tpu_custom_call.1} parent=59 // pred_region
          %p411 = scmp.lt.s32.totalorder %s27, 1
          %s412 = scalar_select %p411, %s27, 1
          %s413 = smul.addr %s412, 8
          %s414 = scalar_lea.vmem %s3, %s413
        $region64: #{tpu_custom_call.1} parent=59 // pred_fallthru
          _
      $region60: #{tpu_custom_call.1} parent=5 // pred_fallthru
        _
    $region6: #{tpu_custom_call.1} parent=1 // loop_footer
      %s20 = sadd.s32 1, %s16
    $region7: #{tpu_custom_call.1} parent=1 // loop_footer_branch
      %15 = sbr.rel target = $region3
    $region8: #{tpu_custom_call.1} parent=1 // loop_exit
      _
    %415 = vsyncpa [#allocation4], 1
    %s416 = scalar_lea.sflag [#allocation4], 1
    %417 = vsyncpa %s416, 1
    %418 = vsyncpa [#allocation8], 1
    %s419 = scalar_lea.sflag [#allocation8], 1
    %420 = vsyncpa %s419, 1
    %421 = vsyncpa [#allocation5], 1
    %s422 = scalar_lea.sflag [#allocation5], 1
    %423 = vsyncpa %s422, 1

</llo_original>
